<compile_context>
chip_gen: v7x
topology: tpu7x:2x2x1
jax: 0.10.0
libtpu: 0.0.40
codegen_flags: <defaults>
</compile_context>

<pallas_src>
import functools
import math

import jax
import jax.numpy as jnp
from jax import lax
from jax.experimental import pallas as pl
from jax.experimental.pallas import tpu as pltpu

_NEG_LOG_1E4 = -math.log(1e-4)  # = log(1e4)


def _sce_kernel(scale_ce, scale_rce, n_valid, tile_n, ragged,
                pred_ref, labels_ref, out_ref):
    # pred_ref  : (C, T) caller dtype (upcast to f32 here)
    # labels_ref: (1, T) i32
    # out_ref   : (8, 1) f32 per-block partial (same value in all 8 rows)
    i = pl.program_id(0)

    logits = pred_ref[...].astype(jnp.float32)            # (C, T)
    labels = labels_ref[...]                               # (1, T) int32
    c, t = logits.shape

    # --- stable softmax pieces (single exp pass over (C, T)) ---
    m = jnp.max(logits, axis=0, keepdims=True)             # (1, T)
    shifted = logits - m                                    # (C, T)
    e = jnp.exp(shifted)                                    # (C, T)  EUP pass
    sum_exp = jnp.sum(e, axis=0, keepdims=True)             # (1, T)
    inv = 1.0 / sum_exp                                      # (1, T) exact divide

    # one-hot select on the class (sublane) axis
    class_ids = lax.broadcasted_iota(jnp.int32, (c, t), dimension=0)
    onehot = class_ids == labels                             # (C, T) bool
    shifted_label = jnp.sum(jnp.where(onehot, shifted, 0.0),
                            axis=0, keepdims=True)           # (1, T)

    # --- cross entropy: ce_i = log(sum_exp) - shifted[label_i] ---
    ce_per = jnp.log(sum_exp) - shifted_label                # (1, T)

    # --- reverse cross entropy ---
    # p_label from shifted_label: exp of the same input == e[label] bit-exactly,
    # so this matches clip(softmax[label], 1e-7, 1) without a second (C,T) pass.
    p_label = jnp.clip(jnp.exp(shifted_label) * inv, 1e-7, 1.0)            # (1, T)
    # sum_c clip(p_c, 1e-7, 1) without the (C,T) multiply / upper clip.
    sum_p = inv * jnp.sum(jnp.maximum(e, jnp.float32(1e-7) * sum_exp),
                          axis=0, keepdims=True)                           # (1, T)
    # -sum(p * log(clamp(onehot,1e-4,1))) == -log(1e-4) * (sum(p) - p[label])
    rce_per = jnp.float32(_NEG_LOG_1E4) * (sum_p - p_label)                # (1, T)

    # fused tail: one weighted vector, one lane reduction
    weighted = (jnp.float32(scale_ce) * ce_per +
                jnp.float32(scale_rce) * rce_per)                          # (1, T)

    def _store(val_1x1):
        out_ref[...] = jnp.broadcast_to(val_1x1, (8, 1))

    if not ragged:
        _store(jnp.sum(weighted, axis=1, keepdims=True))
    else:
        last = pl.num_programs(0) - 1

        @pl.when(i != last)
        def _():
            _store(jnp.sum(weighted, axis=1, keepdims=True))

        @pl.when(i == last)
        def _():
            # ragged tail: mask padded/garbage columns BEFORE the lane reduction
            col = lax.broadcasted_iota(jnp.int32, (1, t), dimension=1)
            valid = (i * tile_n + col) < n_valid
            _store(jnp.sum(jnp.where(valid, weighted, 0.0),
                           axis=1, keepdims=True))


def sce_loss(pred, labels, alpha=0.1, beta=1.0, num_classes=10, tile_n=32768,
             class_major=False):
    """Symmetric cross-entropy loss.

    pred:   (N, C) logits in any float dtype (bf16 halves HBM traffic; the
            kernel upcasts to f32), or (C, N) if class_major=True — the
            preferred producer contract, which skips the transpose copy.
    labels: (N,) integer class ids.
    Returns a scalar f32 loss.
    """
    if class_major:
        c, n = pred.shape
        pred_cm = pred                                   # zero-copy fast path
    else:
        n, c = pred.shape
        # TODO(synk): prototype an in-kernel variant that DMAs contiguous
        # (TILE_N, C) slabs of the untransposed array and transposes in VMEM,
        # and measure it against this XLA copy; producers that can emit
        # class-major logits should pass class_major=True instead.
        pred_cm = jnp.transpose(pred)                    # (C, N)
    assert c == num_classes

    labels2d = labels.astype(jnp.int32).reshape(1, n)

    # No padding: either one full-width block (t == n, always layout-legal) or
    # lane-aligned tiles with a ragged, in-kernel-masked last block.
    if tile_n >= n:
        t = n
    else:
        t = max((tile_n // 128) * 128, 128)
    grid = pl.cdiv(n, t)
    ragged = (n % t) != 0

    kernel = functools.partial(_sce_kernel, alpha / n, beta / n, n, t, ragged)

    partials = pl.pallas_call(
        kernel,
        # per-block partials; (8, 1) blocks keep the sublane dim 8-aligned
        out_shape=jax.ShapeDtypeStruct((8 * grid, 1), jnp.float32),
        grid_spec=pltpu.PrefetchScalarGridSpec(
            num_scalar_prefetch=0,
            grid=(grid,),
            in_specs=[
                # add pipeline_mode=pl.Buffered(3) here if xprof shows exposed
                # DMA at tile boundaries on v5e
                pl.BlockSpec((c, t), lambda i: (0, i)),
                pl.BlockSpec((1, t), lambda i: (0, i)),
            ],
            out_specs=pl.BlockSpec((8, 1), lambda i: (i, 0)),
        ),
        compiler_params=pltpu.CompilerParams(
            dimension_semantics=("parallel",)),
    )(pred_cm, labels2d)

    # each block's 8 rows carry the same partial; take row 0 of each and sum
    return jnp.sum(jnp.reshape(partials, (grid, 8))[:, 0])


def _reference(pred, labels, alpha=0.1, beta=1.0, num_classes=10):
    logp = jax.nn.log_softmax(pred.astype(jnp.float32), axis=1)
    oh = jax.nn.one_hot(labels, num_classes, dtype=jnp.float32)
    ce = -jnp.mean(jnp.sum(oh * logp, axis=1))
    p = jnp.clip(jnp.exp(logp), 1e-07, 1.0)
    oh_c = jnp.clip(oh, 1e-4, 1.0)
    rce = jnp.mean(-jnp.sum(p * jnp.log(oh_c), axis=1))
    return alpha * ce + beta * rce


if __name__ == "__main__":
    key = jax.random.PRNGKey(0)
    k1, k2 = jax.random.split(key)
    N, C = 200, 10
    pred = jax.random.normal(k1, (N, C), dtype=jnp.float32) * 2.0
    labels = jax.random.randint(k2, (N,), 0, C, dtype=jnp.int32)

    ref = _reference(pred, labels, alpha=0.1, beta=1.0, num_classes=C)

    # multi-block ragged path: tile=128 -> grid=2, last block has 72 valid cols;
    # exercises per-block partial sums, parallel semantics and tail masking.
    loss_tiled = jax.block_until_ready(
        sce_loss(pred, labels, alpha=0.1, beta=1.0, num_classes=C, tile_n=128))
    assert jnp.allclose(loss_tiled, ref, atol=1e-5, rtol=1e-5), (loss_tiled, ref)

    # default (single full-width block) path
    loss_big = jax.block_until_ready(
        sce_loss(pred, labels, alpha=0.1, beta=1.0, num_classes=C))
    assert jnp.allclose(loss_big, ref, atol=1e-5, rtol=1e-5), (loss_big, ref)

    # class-major zero-copy contract (preferred producer layout)
    loss_cm = jax.block_until_ready(
        sce_loss(jnp.transpose(pred), labels, alpha=0.1, beta=1.0,
                 num_classes=C, class_major=True))
    assert jnp.allclose(loss_cm, ref, atol=1e-5, rtol=1e-5), (loss_cm, ref)

    # bf16 logits flow straight through the DMA and are upcast in-kernel
    pred_bf16 = pred.astype(jnp.bfloat16)
    ref_bf16 = _reference(pred_bf16, labels, alpha=0.1, beta=1.0, num_classes=C)
    loss_bf16 = jax.block_until_ready(
        sce_loss(pred_bf16, labels, alpha=0.1, beta=1.0, num_classes=C,
                 tile_n=128))
    assert jnp.allclose(loss_bf16, ref_bf16, atol=1e-5, rtol=1e-5), (
        loss_bf16, ref_bf16)

    print("KERNEL_OK")
</pallas_src>

<mosaic_0001>
module attributes {stable_mosaic.version = 11 : i64} {
  func.func @_sce_kernel(%arg0: i32, %arg1: memref<10x128xf32, #tpu.memory_space<vmem>>, %arg2: memref<1x128xi32, #tpu.memory_space<vmem>>, %arg3: memref<8x1xf32, #tpu.memory_space<vmem>>) attributes {dimension_semantics = [#tpu.dimension_semantics<parallel>], iteration_bounds = array<i64: 2>, scalar_prefetch = 0 : i64, scratch_operands = 0 : i64, tpu.core_type = #tpu.core_type<tc>, window_params = [{transform_indices = @transform_0, window_bounds = array<i64: 10, 128>}, {transform_indices = @transform_1, window_bounds = array<i64: 1, 128>}, {transform_indices = @transform_2, window_bounds = array<i64: 8, 1>}]} {
    %c0 = arith.constant 0 : index
    %c0_0 = arith.constant 0 : index
    %0 = vector.load %arg1[%c0, %c0_0] : memref<10x128xf32, #tpu.memory_space<vmem>>, vector<10x128xf32>
    %c0_1 = arith.constant 0 : index
    %c0_2 = arith.constant 0 : index
    %1 = vector.load %arg2[%c0_1, %c0_2] : memref<1x128xi32, #tpu.memory_space<vmem>>, vector<1x128xi32>
    %cst = arith.constant dense<0xFF800000> : vector<128xf32>
    %2 = vector.multi_reduction <maximumf>, %0, %cst [0] : vector<10x128xf32> to vector<128xf32>
    %3 = vector.shape_cast %2 : vector<128xf32> to vector<1x128xf32>
    %4 = vector.broadcast %3 : vector<1x128xf32> to vector<10x128xf32>
    %5 = arith.subf %0, %4 : vector<10x128xf32>
    %6 = math.exp %5 : vector<10x128xf32>
    %cst_3 = arith.constant dense<0.000000e+00> : vector<128xf32>
    %7 = vector.multi_reduction <add>, %6, %cst_3 [0] : vector<10x128xf32> to vector<128xf32>
    %8 = vector.shape_cast %7 : vector<128xf32> to vector<1x128xf32>
    %cst_4 = arith.constant 1.000000e+00 : f32
    %9 = vector.broadcast %cst_4 : f32 to vector<1x128xf32>
    %10 = arith.divf %9, %8 : vector<1x128xf32>
    %11 = tpu.iota {dimensions = array<i32: 0>} : vector<10x128xi32>
    %12 = vector.broadcast %1 : vector<1x128xi32> to vector<10x128xi32>
    %13 = arith.cmpi eq, %11, %12 : vector<10x128xi32>
    %cst_5 = arith.constant 0.000000e+00 : f32
    %14 = vector.broadcast %cst_5 : f32 to vector<10x128xf32>
    %15 = arith.select %13, %5, %14 : vector<10x128xi1>, vector<10x128xf32>
    %cst_6 = arith.constant dense<0.000000e+00> : vector<128xf32>
    %16 = vector.multi_reduction <add>, %15, %cst_6 [0] : vector<10x128xf32> to vector<128xf32>
    %17 = vector.shape_cast %16 : vector<128xf32> to vector<1x128xf32>
    %18 = math.log %8 : vector<1x128xf32>
    %19 = arith.subf %18, %17 : vector<1x128xf32>
    %20 = math.exp %17 : vector<1x128xf32>
    %21 = arith.mulf %20, %10 : vector<1x128xf32>
    %cst_7 = arith.constant 1.000000e-07 : f32
    %cst_8 = arith.constant 1.000000e+00 : f32
    %22 = vector.broadcast %cst_7 : f32 to vector<1x128xf32>
    %23 = arith.maximumf %22, %21 : vector<1x128xf32>
    %24 = vector.broadcast %cst_8 : f32 to vector<1x128xf32>
    %25 = arith.minimumf %24, %23 : vector<1x128xf32>
    %cst_9 = arith.constant 1.000000e-07 : f32
    %26 = vector.broadcast %cst_9 : f32 to vector<1x128xf32>
    %27 = arith.mulf %26, %8 : vector<1x128xf32>
    %28 = vector.broadcast %27 : vector<1x128xf32> to vector<10x128xf32>
    %29 = arith.maximumf %6, %28 : vector<10x128xf32>
    %cst_10 = arith.constant dense<0.000000e+00> : vector<128xf32>
    %30 = vector.multi_reduction <add>, %29, %cst_10 [0] : vector<10x128xf32> to vector<128xf32>
    %31 = vector.shape_cast %30 : vector<128xf32> to vector<1x128xf32>
    %32 = arith.mulf %10, %31 : vector<1x128xf32>
    %33 = arith.subf %32, %25 : vector<1x128xf32>
    %cst_11 = arith.constant 9.21034049 : f32
    %34 = vector.broadcast %cst_11 : f32 to vector<1x128xf32>
    %35 = arith.mulf %34, %33 : vector<1x128xf32>
    %cst_12 = arith.constant 5.000000e-04 : f32
    %36 = vector.broadcast %cst_12 : f32 to vector<1x128xf32>
    %37 = arith.mulf %36, %19 : vector<1x128xf32>
    %cst_13 = arith.constant 5.000000e-03 : f32
    %38 = vector.broadcast %cst_13 : f32 to vector<1x128xf32>
    %39 = arith.mulf %38, %35 : vector<1x128xf32>
    %40 = arith.addf %37, %39 : vector<1x128xf32>
    %c1_i32 = arith.constant 1 : i32
    %41 = arith.cmpi ne, %arg0, %c1_i32 : i32
    %42 = arith.extui %41 : i1 to i32
    %c0_i32 = arith.constant 0 : i32
    %43 = arith.cmpi ne, %42, %c0_i32 : i32
    scf.if %43 {
      %cst_16 = arith.constant dense<0.000000e+00> : vector<1xf32>
      %47 = vector.multi_reduction <add>, %40, %cst_16 [1] : vector<1x128xf32> to vector<1xf32>
      %48 = vector.shape_cast %47 : vector<1xf32> to vector<1x1xf32>
      %49 = vector.shape_cast %48 : vector<1x1xf32> to vector<1x1xf32>
      %50 = vector.broadcast %49 : vector<1x1xf32> to vector<8x1xf32>
      %c0_17 = arith.constant 0 : index
      %c0_18 = arith.constant 0 : index
      %51 = vector.load %arg3[%c0_17, %c0_18] : memref<8x1xf32, #tpu.memory_space<vmem>>, vector<8x1xf32>
      tpu.vector_store %arg3[%c0_17, %c0_18], %50 {strides = array<i32>} : memref<8x1xf32, #tpu.memory_space<vmem>>, vector<8x1xf32>,
    } else {
    }
    %c1_i32_14 = arith.constant 1 : i32
    %44 = arith.cmpi eq, %arg0, %c1_i32_14 : i32
    %45 = arith.extui %44 : i1 to i32
    %c0_i32_15 = arith.constant 0 : i32
    %46 = arith.cmpi ne, %45, %c0_i32_15 : i32
    scf.if %46 {
      %47 = tpu.iota {dimensions = array<i32: 1>} : vector<1x128xi32>
      %c128_i32 = arith.constant 128 : i32
      %48 = arith.muli %arg0, %c128_i32 : i32
      %49 = vector.broadcast %48 : i32 to vector<1x128xi32>
      %50 = arith.addi %49, %47 : vector<1x128xi32>
      %c200_i32 = arith.constant 200 : i32
      %51 = vector.broadcast %c200_i32 : i32 to vector<1x128xi32>
      %52 = arith.cmpi slt, %50, %51 : vector<1x128xi32>
      %cst_16 = arith.constant 0.000000e+00 : f32
      %53 = vector.broadcast %cst_16 : f32 to vector<1x128xf32>
      %54 = arith.select %52, %40, %53 : vector<1x128xi1>, vector<1x128xf32>
      %cst_17 = arith.constant dense<0.000000e+00> : vector<1xf32>
      %55 = vector.multi_reduction <add>, %54, %cst_17 [1] : vector<1x128xf32> to vector<1xf32>
      %56 = vector.shape_cast %55 : vector<1xf32> to vector<1x1xf32>
      %57 = vector.shape_cast %56 : vector<1x1xf32> to vector<1x1xf32>
      %58 = vector.broadcast %57 : vector<1x1xf32> to vector<8x1xf32>
      %c0_18 = arith.constant 0 : index
      %c0_19 = arith.constant 0 : index
      %59 = vector.load %arg3[%c0_18, %c0_19] : memref<8x1xf32, #tpu.memory_space<vmem>>, vector<8x1xf32>
      tpu.vector_store %arg3[%c0_18, %c0_19], %58 {strides = array<i32>} : memref<8x1xf32, #tpu.memory_space<vmem>>, vector<8x1xf32>,
    } else {
    }
    return
  }
  func.func @transform_0(%arg0: i32) -> (i32, i32) {
    %c0_i32 = arith.constant 0 : i32
    %c0_i32_0 = arith.constant 0 : i32
    return %c0_i32, %arg0 : i32, i32
  }
  func.func @transform_1(%arg0: i32) -> (i32, i32) {
    %c0_i32 = arith.constant 0 : i32
    %c0_i32_0 = arith.constant 0 : i32
    return %c0_i32, %arg0 : i32, i32
  }
  func.func @transform_2(%arg0: i32) -> (i32, i32) {
    %c0_i32 = arith.constant 0 : i32
    %c0_i32_0 = arith.constant 0 : i32
    return %arg0, %c0_i32 : i32, i32
  }
}

</mosaic_0001>

<llo_original>
// kernel: tpu_custom_call.1
$region0: #{tpu_custom_call.1}
  #allocation0 [shape = 'u32[]', space=smem, size = 0x4, offset = 0x4, fixed_abs, tag = 'smem constant byte address 0x4 - core index']
  #allocation1 [shape = 'u32[144,128]{1,0:T(1,128)}', space=vmem, size = 0x12000, scoped, tag = 'internal scratch']
  %s0 = inlined_call_operand.hbm [shape: f32[10,200], index: 0, kind: input, shape index: {}]
  %s1 = inlined_call_operand.vmem [shape: s32[1,200], index: 1, kind: input, shape index: {}]
  %s2 = inlined_call_operand.vmem [shape: f32[16,1], index: 2, kind: output, shape index: {}]
  %s3 = sld [smem:[#allocation0]]
  $region53: #{tpu_custom_call.1} parent=0
    _
  %s5 = ssub.s32 1, %s3
  %s6 = scalar_select 0, %s5, %s3
  $region1: #{tpu_custom_call.1} parent=0
    #allocation2 [shape = 'u8[16384]{0}', space=vmem, size = 0x4000, scoped, tag = 'input window, operand 0']
    #allocation3 [shape = 's32[2]{0}', space=sflag, size = 0x8, scoped, tag = 'scoped memory for tpu_custom_call.1']
    %7 = vsyncpa [#allocation3], 0
    %s8 = scalar_lea.sflag [#allocation3], 1
    %9 = vsyncpa %s8, 0
    loop: start=0, step=1, limit=4
    $region2: #{tpu_custom_call.1} parent=1 // loop_pre_header
      _
    $region3: #{tpu_custom_call.1} parent=1 // loop_header
      %s11 = sphi 0, %s15
      %p12 = scmp.ge.s32.totalorder %s11, 4
      %s21 = sphi 0, %s23
      %s24 = sphi 0, %s21
      %s25 = sphi 0, %s24
      %s41 = sphi 0, %s25
      %s47 = sphi 0, %s49
      %s50 = sphi 0, %s47
      %s51 = sphi 0, %s50
      %s67 = sphi 0, %s51
      %s73 = sphi 0, %s75
      %s76 = sphi 0, %s73
      %s77 = sphi 0, %s76
      %s93 = sphi 0, %s77
    $region4: #{tpu_custom_call.1} parent=1 // loop_header_branch
      %14 = sbr.rel (%p12) target = $region8
    $region5: #{tpu_custom_call.1} parent=1 // loop_body
      %s16 = ssub.s32 %s11, 1
      %s17 = ssub.s32 %s11, 2
      %s18 = sadd.s32 %s11, 1
      %s19 = ssub.s32 %s11, %s18
      %p20 = scmp.eq.s32.totalorder %s19, 0
      %s22 = sadd.s32 %s21, 1
      %s23 = scalar_select %p20, %s21, %s22
      %p26 = pneg %p20
      %p27 = scmp.eq.s32.totalorder %s11, 1
      %p28 = por %p26, %p27
      %p29 = scmp.ne.s32.totalorder %s21, %s24
      %p30 = scmp.eq.s32.totalorder %s11, 0
      %p31 = por %p29, %p30
      %p32 = scmp.ne.s32.totalorder %s21, %s24
      %p33 = scmp.eq.s32.totalorder %s16, 1
      %p34 = por %p32, %p33
      %p35 = scmp.ne.s32.totalorder %s24, %s25
      %p36 = scmp.eq.s32.totalorder %s16, 0
      %p37 = por %p35, %p36
      %p38 = scmp.ne.s32.totalorder %s24, %s25
      %p39 = scmp.eq.s32.totalorder %s17, 1
      %p40 = por %p38, %p39
      %p42 = scmp.ne.s32.totalorder %s25, %s41
      %p43 = scmp.eq.s32.totalorder %s17, 0
      %p44 = por %p42, %p43
      %s45 = ssub.s32 %s11, %s18
      %p46 = scmp.eq.s32.totalorder %s45, 0
      %s48 = sadd.s32 %s47, 1
      %s49 = scalar_select %p46, %s47, %s48
      %p52 = pneg %p46
      %p53 = scmp.eq.s32.totalorder %s11, 1
      %p54 = por %p52, %p53
      %p55 = scmp.ne.s32.totalorder %s47, %s50
      %p56 = scmp.eq.s32.totalorder %s11, 0
      %p57 = por %p55, %p56
      %p58 = scmp.ne.s32.totalorder %s47, %s50
      %p59 = scmp.eq.s32.totalorder %s16, 1
      %p60 = por %p58, %p59
      %p61 = scmp.ne.s32.totalorder %s50, %s51
      %p62 = scmp.eq.s32.totalorder %s16, 0
      %p63 = por %p61, %p62
      %p64 = scmp.ne.s32.totalorder %s50, %s51
      %p65 = scmp.eq.s32.totalorder %s17, 1
      %p66 = por %p64, %p65
      %p68 = scmp.ne.s32.totalorder %s51, %s67
      %p69 = scmp.eq.s32.totalorder %s17, 0
      %p70 = por %p68, %p69
      %s71 = ssub.s32 %s11, %s18
      %p72 = scmp.eq.s32.totalorder %s71, 0
      %s74 = sadd.s32 %s73, 1
      %s75 = scalar_select %p72, %s73, %s74
      %p78 = pneg %p72
      %p79 = scmp.eq.s32.totalorder %s11, 1
      %p80 = por %p78, %p79
      %p81 = scmp.ne.s32.totalorder %s73, %s76
      %p82 = scmp.eq.s32.totalorder %s11, 0
      %p83 = por %p81, %p82
      %p84 = scmp.ne.s32.totalorder %s73, %s76
      %p85 = scmp.eq.s32.totalorder %s16, 1
      %p86 = por %p84, %p85
      %p87 = scmp.ne.s32.totalorder %s76, %s77
      %p88 = scmp.eq.s32.totalorder %s16, 0
      %p89 = por %p87, %p88
      %p90 = scmp.ne.s32.totalorder %s76, %s77
      %p91 = scmp.eq.s32.totalorder %s17, 1
      %p92 = por %p90, %p91
      %p94 = scmp.ne.s32.totalorder %s77, %s93
      %p95 = scmp.eq.s32.totalorder %s17, 0
      %p96 = por %p94, %p95
      %p97 = scmp.le.s32.totalorder 1, %s11
      %p98 = scmp.lt.s32.totalorder %s11, 3
      %p99 = pnand %p97, %p98
      %p100 = pneg %p99
      // Predicated region
      $region9: #{tpu_custom_call.1} parent=5 // pred_check
        _
      $region10: #{tpu_custom_call.1} parent=5 // pred_check_branch
        %102 = sbr.rel (%p99) target = $region12
      $region11: #{tpu_custom_call.1} parent=5 // pred_region
        %s103 = ssub.s32 %s11, 1
      $region12: #{tpu_custom_call.1} parent=5 // pred_fallthru
        _
      %p104 = scmp.lt.s32.totalorder %s11, 2
      // Predicated region
      $region13: #{tpu_custom_call.1} parent=5 // pred_check
        %p105 = pneg %p104
      $region14: #{tpu_custom_call.1} parent=5 // pred_check_branch
        %107 = sbr.rel (%p105) target = $region16
      $region15: #{tpu_custom_call.1} parent=5 // pred_region
        // Predicated region
        $region17: #{tpu_custom_call.1} parent=15 // pred_check
          %p108 = pneg %p31
        $region18: #{tpu_custom_call.1} parent=15 // pred_check_branch
          %110 = sbr.rel (%p108) target = $region20
        $region19: #{tpu_custom_call.1} parent=15 // pred_region
          %s111 = sand.u32 %s21, 1
          %s112 = scalar_lea.sflag [#allocation3], %s111
          %s113 = sand.u32 %s21, 1
          %s114 = smul.addr %s113, 16
          %s115 = scalar_lea.vmem [#allocation2], %s114
          %s117 = ssub.s32 256, 256
          %118 = vsyncadd %s112, %s117
          %s119 = smul.addr %s11, 128
          %s120 = scalar_lea.hbm %s0, %s119
          %s121 = sshll.u32 %s115, 4
          %s122 = int_to_ptr.vmem [resolvable:$true] %s121
          %127 = dma.hbm_to_vmem [thread:$0]  %s120, 256, %s122, %s112, 256, 128, 8
        $region20: #{tpu_custom_call.1} parent=15 // pred_fallthru
          _
        // Predicated region
        $region21: #{tpu_custom_call.1} parent=15 // pred_check
          %p128 = pneg %p57
        $region22: #{tpu_custom_call.1} parent=15 // pred_check_branch
          %130 = sbr.rel (%p128) target = $region24
        $region23: #{tpu_custom_call.1} parent=15 // pred_region
          %p131 = scmp.lt.s32.totalorder %s11, 1
          %s132 = scalar_select %p131, %s11, 1
          %s133 = scalar_lea.vmem %s1, %s132
        $region24: #{tpu_custom_call.1} parent=15 // pred_fallthru
          _
      $region16: #{tpu_custom_call.1} parent=5 // pred_fallthru
        _
      %p134 = scmp.le.s32.totalorder 1, %s11
      %p135 = scmp.lt.s32.totalorder %s11, 3
      %p136 = pnand %p134, %p135
      %p137 = pneg %p136
      // Predicated region
      $region25: #{tpu_custom_call.1} parent=5 // pred_check
        _
      $region26: #{tpu_custom_call.1} parent=5 // pred_check_branch
        %139 = sbr.rel (%p136) target = $region28
      $region27: #{tpu_custom_call.1} parent=5 // pred_region
        %s140 = ssub.s32 %s11, 1
        %s141 = sand.u32 %s24, 1
        %s142 = scalar_lea.sflag [#allocation3], %s141
        %s143 = sand.u32 %s24, 1
        %s144 = smul.addr %s143, 16
        %s145 = scalar_lea.vmem [#allocation2], %s144
        // Predicated region
        $region29: #{tpu_custom_call.1} parent=27 // pred_check
          %p146 = pneg %p37
        $region30: #{tpu_custom_call.1} parent=27 // pred_check_branch
          %148 = sbr.rel (%p146) target = $region32
        $region31: #{tpu_custom_call.1} parent=27 // pred_region
          %149 = dma.done %s142, 256
        $region32: #{tpu_custom_call.1} parent=27 // pred_fallthru
          _
        %s150 = sand.u32 %s24, 1
        %s151 = scalar_lea.sflag [#allocation3], %s150
        %s152 = sand.u32 %s24, 1
        %s153 = smul.addr %s152, 16
        %s154 = scalar_lea.vmem [#allocation2], %s153
        %p155 = pneg %p37
        %p156 = pneg %p34
        %p157 = scmp.lt.s32.totalorder %s16, 1
        %s158 = scalar_select %p157, %s16, 1
        %s159 = scalar_lea.vmem %s1, %s158
        %p160 = pneg %p63
        %p161 = pneg %p60
        %p162 = pneg %p89
        %p163 = pneg %p86
        %p164 = scmp.lt.s32.totalorder %s16, 1
        %s165 = scalar_select %p164, %s16, 1
        %s166 = smul.addr %s165, 8
        %s167 = scalar_lea.vmem %s2, %s166
        %p168 = scmp.lt.s32.totalorder %s16, 1
        %s169 = scalar_select %p168, %s16, 1
        %s170 = scalar_lea.vmem %s1, %s169
        %p171 = scmp.lt.s32.totalorder %s16, 1
        %s172 = scalar_select %p171, %s16, 1
        %s173 = smul.addr %s172, 8
        %s174 = scalar_lea.vmem %s2, %s173
        %v175 = vld [vmem:[%s145] sm:$0xff]
        %v176 = vld [vmem:[%s145 + $0x8] sm:$0x3]
        %v177 = vld [vmem:[%s170] sm:$0x1]
        %vm178 = vcmask 1041408
        %v179 = vsel %vm178, %v176, -inf
        %v180 = vmax.f32 %v175, %v179
        %v181 = vrot.slane %v180, 4
        %v182 = vmax.f32 %v180, %v181
        %v183 = vrot.slane %v182, 2
        %v184 = vmax.f32 %v182, %v183
        %v185 = vrot.slane %v184, 1
        %v186 = vmax.f32 %v184, %v185
        %v187 = vsub.f32 %v175, %v186
        %v188 = vsub.f32 %v176, %v186
        %v189 = vmul.f32 %v187, 1.442695
        %v190 = vpow.pop %v189
        %v191 = vmul.f32 %v188, 1.442695
        %v192 = vpow.pop %v191
        %v193 = vsel %vm178, %v192, 0.0
        %v194 = vadd.f32 %v190, %v193
        %v195 = vrot.slane %v194, 4
        %v196 = vadd.f32 %v194, %v195
        %v197 = vrot.slane %v196, 2
        %v198 = vadd.f32 %v196, %v197
        %v199 = vrot.slane %v198, 1
        %v200 = vadd.f32 %v198, %v199
        %v201 = vrcp.pop %v200
        %v202 = vmul.f32 1.0, %v201
        %v203 = vlaneseq
        %v204 = vshrl.u32 %v203, 7
        %v205 = vadd.s32 %v204, 8
        %v206 = vlaneseq
        %v207 = vshrl.u32 %v206, 7
        %v208 = vsub.s32 0, %v207
        %v209 = vrot.slane %v177, %v208
        %vm210 = vcmp.eq.s32.totalorder %v204, %v209
        %vm211 = vcmp.eq.s32.totalorder %v205, %v209
        %v212 = vsel %vm210, %v187, 0.0
        %v213 = vsel %vm211, %v188, 0.0
        %v214 = vsel %vm178, %v213, 0.0
        %v215 = vadd.f32 %v212, %v214
        %v216 = vrot.slane %v215, 4
        %v217 = vadd.f32 %v215, %v216
        %v218 = vrot.slane %v217, 2
        %v219 = vadd.f32 %v217, %v218
        %v220 = vrot.slane %v219, 1
        %v221 = vadd.f32 %v219, %v220
        %v222 = vlog2.pop %v200
        %v223 = vmul.f32 %v222, 0.6931472
        %v224 = vsub.f32 %v223, %v221
        %v225 = vmul.f32 %v221, 1.442695
        %v226 = vpow.pop %v225
        %v227 = vmul.f32 %v226, %v202
        %v228 = vmax.f32 %v227, 1e-07
        %v229 = vmin.f32 %v228, 1.0
        %v230 = vmul.f32 %v200, 1e-07
        %v231 = vmax.f32 %v190, %v230
        %v232 = vmax.f32 %v192, %v230
        %v233 = vsel %vm178, %v232, 0.0
        %v234 = vadd.f32 %v231, %v233
        %v235 = vrot.slane %v234, 4
        %v236 = vadd.f32 %v234, %v235
        %v237 = vrot.slane %v236, 2
        %v238 = vadd.f32 %v236, %v237
        %v239 = vrot.slane %v238, 1
        %v240 = vadd.f32 %v238, %v239
        %v241 = vmul.f32 %v202, %v240
        %v242 = vsub.f32 %v241, %v229
        %v243 = vmul.f32 %v242, 9.2103405
        %v244 = vmul.f32 %v224, 0.0005
        %v245 = vmul.f32 %v243, 0.005
        %v246 = vadd.f32 %v244, %v245
        %p247 = scmp.ne.s32.totalorder %s16, 1
        // Predicated region
        $region33: #{tpu_custom_call.1} parent=27 // pred_check
          %p248 = pneg %p247
        $region34: #{tpu_custom_call.1} parent=27 // pred_check_branch
          %250 = sbr.rel (%p248) target = $region36
        $region35: #{tpu_custom_call.1} parent=27 // pred_region
          %251 = vadd.xlane.f32.xlu0 %v246
          %v252 = vpop.xlane.xlu0 %251
          %vm253 = vcmask 7168
          %254 = vst.msk [vmem:[%s174] sm:$0xff] %vm253, %v252
        $region36: #{tpu_custom_call.1} parent=27 // pred_fallthru
          _
        %p255 = scmp.eq.s32.totalorder %s16, 1
        // Predicated region
        $region37: #{tpu_custom_call.1} parent=27 // pred_check
          %p256 = pneg %p255
        $region38: #{tpu_custom_call.1} parent=27 // pred_check_branch
          %258 = sbr.rel (%p256) target = $region40
        $region39: #{tpu_custom_call.1} parent=27 // pred_region
          %v259 = vlaneseq
          %v260 = vand.u32 %v259, 127
          %s261 = smul.u32 %s16, 128
          %v262 = vstv %s261
          %v263 = vadd.s32 %v262, %v260
          %vm264 = vcmp.lt.s32.totalorder %v263, 200
          %v265 = vsel %vm264, %v246, 0.0
          %266 = vadd.xlane.f32.xlu0 %v265
          %v267 = vpop.xlane.xlu0 %266
          %vm268 = vcmask 7168
          %269 = vst.msk [vmem:[%s174] sm:$0xff] %vm268, %v267
        $region40: #{tpu_custom_call.1} parent=27 // pred_fallthru
          _
        %p270 = scmp.lt.s32.totalorder %s16, 1
        %s271 = scalar_select %p270, %s16, 1
        %s272 = smul.addr %s271, 8
        %s273 = scalar_lea.vmem %s2, %s272
        // Predicated region
        $region41: #{tpu_custom_call.1} parent=27 // pred_check
          %p274 = pneg %p86
        $region42: #{tpu_custom_call.1} parent=27 // pred_check_branch
          %276 = sbr.rel (%p274) target = $region44
        $region43: #{tpu_custom_call.1} parent=27 // pred_region
          _
        $region44: #{tpu_custom_call.1} parent=27 // pred_fallthru
          _
      $region28: #{tpu_custom_call.1} parent=5 // pred_fallthru
        _
      %p277 = scmp.le.s32.totalorder 2, %s11
      // Predicated region
      $region45: #{tpu_custom_call.1} parent=5 // pred_check
        %p278 = pneg %p277
      $region46: #{tpu_custom_call.1} parent=5 // pred_check_branch
        %280 = sbr.rel (%p278) target = $region48
      $region47: #{tpu_custom_call.1} parent=5 // pred_region
        %s281 = ssub.s32 %s11, 2
        // Predicated region
        $region49: #{tpu_custom_call.1} parent=47 // pred_check
          %p282 = pneg %p92
        $region50: #{tpu_custom_call.1} parent=47 // pred_check_branch
          %284 = sbr.rel (%p282) target = $region52
        $region51: #{tpu_custom_call.1} parent=47 // pred_region
          %p285 = scmp.lt.s32.totalorder %s17, 1
          %s286 = scalar_select %p285, %s17, 1
          %s287 = smul.addr %s286, 8
          %s288 = scalar_lea.vmem %s2, %s287
        $region52: #{tpu_custom_call.1} parent=47 // pred_fallthru
          _
      $region48: #{tpu_custom_call.1} parent=5 // pred_fallthru
        _
    $region6: #{tpu_custom_call.1} parent=1 // loop_footer
      %s15 = sadd.s32 1, %s11
    $region7: #{tpu_custom_call.1} parent=1 // loop_footer_branch
      %10 = sbr.rel target = $region3
    $region8: #{tpu_custom_call.1} parent=1 // loop_exit
      _
    %289 = vsyncpa [#allocation3], 1
    %s290 = scalar_lea.sflag [#allocation3], 1
    %291 = vsyncpa %s290, 1

</llo_original>
